<compile_context>
chip_gen: v5e
topology: v5e:2x2
jax: 0.10.0
libtpu: 0.0.40
codegen_flags: <defaults>
</compile_context>

<pallas_src>
import functools
import math

import jax
import jax.numpy as jnp
from jax.experimental import pallas as pl
from jax.experimental.pallas import tpu as pltpu


_SUBLANE = 8
_LANE = 128
_MIN_SPLIT_COST = 32 * 1024 * 1024     # above this VMEM-cost, keep >= 4 grid steps


def _round_up(v, m):
    return ((v + m - 1) // m) * m


@functools.lru_cache(maxsize=None)
def _vmem_limit_bytes():
    """Generation-aware scoped-VMEM limit (v5e/v6e: 128 MiB phys, v7x: 64 MiB)."""
    cap = 64 * 1024 * 1024             # conservative default = v7x per-core VMEM
    try:
        cap = int(pltpu.get_tpu_info().vmem_capacity_bytes)
    except Exception:
        pass
    return int(min(max(cap * 3 // 4, 32 * 1024 * 1024), 96 * 1024 * 1024))


@functools.lru_cache(maxsize=None)
def _tile_budget():
    # Per-tile VMEM *cost* budget: covers double-buffered in+out at the input
    # dtype plus ~3 live full-tile f32 temporaries inside the kernel.
    return int(_vmem_limit_bytes() * 6 // 10)


def _mosaic_params(dims):
    return pltpu.CompilerParams(dimension_semantics=dims,
                                vmem_limit_bytes=_vmem_limit_bytes())


def _elem_cost(itemsize):
    # Bytes of VMEM per logical element: 2x(in+out) at input dtype + ~3 f32 temps.
    return 4 * int(itemsize) + 3 * 4


def _pick_row_tile(n_rows, row_cost, itemsize):
    """Largest row tile (2nd-minor dim) fitting the VMEM budget, sublane aligned."""
    n_rows = max(int(n_rows), 1)
    align = _SUBLANE * max(1, 4 // max(int(itemsize), 1))   # 8 f32 / 16 bf16 / 32 int8
    t = max(align, (_tile_budget() // max(int(row_cost), 1)) // align * align)
    # v7x has 2 TensorCores/chip: keep >= 4 grid steps on non-tiny inputs so the
    # "parallel" axis can be split across cores and DMA/compute stays overlapped.
    if n_rows * row_cost >= _MIN_SPLIT_COST:
        t = min(t, max(align, _round_up(-(-n_rows // 4), align)))
    return int(min(t, _round_up(n_rows, align)))


# ----------------------------------------------------------------------------
# Kernels
# ----------------------------------------------------------------------------
def _ln_rows_kernel(x_ref, w_ref, b_ref, o_ref, *, eps, inv_c):
    # x: (tm, C), C on the lane axis. Two-pass stats (parity with F.layer_norm).
    x = x_ref[...].astype(jnp.float32)
    mean = jnp.sum(x, axis=-1, keepdims=True) * inv_c
    d = x - mean
    var = jnp.sum(d * d, axis=-1, keepdims=True) * inv_c
    inv = jax.lax.rsqrt(var + eps)                       # (tm, 1)
    w = w_ref[...].astype(jnp.float32)                   # (1, C)
    b = b_ref[...].astype(jnp.float32)
    o_ref[...] = (d * (inv * w) + b).astype(o_ref.dtype)


def _ln_dense_kernel(x_ref, w_ref, b_ref, s_ref, o_ref, *, eps, inv_c):
    # Lane-dense small-C path: each 128-lane row packs P = 128 // C logical
    # rows of C channels. Segmented (per-group) sums via a block-diagonal ones
    # matmul on the otherwise idle MXU; two-pass variance.
    x = x_ref[...].astype(jnp.float32)                   # (tm, 128)
    s = s_ref[...]                                       # (128, 128) block-diag ones
    mean = jnp.dot(x, s, preferred_element_type=jnp.float32) * inv_c
    d = x - mean
    var = jnp.dot(d * d, s, preferred_element_type=jnp.float32) * inv_c
    inv = jax.lax.rsqrt(var + eps)                       # (tm, 128), per-group
    w = w_ref[...].astype(jnp.float32)                   # (1, 128), channel-tiled
    b = b_ref[...].astype(jnp.float32)
    o_ref[...] = (d * (inv * w) + b).astype(o_ref.dtype)


def _ln_cfirst_kernel(x_ref, w_ref, b_ref, o_ref, *, eps, inv_c):
    # channels_first native layout: block (nb, C, t_hw); reduce over C (the
    # sublane axis), H*W stays lane-dense; nb images batched per grid step.
    x = x_ref[...].astype(jnp.float32)                   # (nb, C, t_hw)
    mean = jnp.sum(x, axis=1, keepdims=True) * inv_c     # (nb, 1, t_hw)
    d = x - mean
    var = jnp.sum(d * d, axis=1, keepdims=True) * inv_c
    inv = jax.lax.rsqrt(var + eps)
    w = w_ref[...].astype(jnp.float32)                   # (1, C, 1)
    b = b_ref[...].astype(jnp.float32)
    o_ref[...] = (d * inv * w + b).astype(o_ref.dtype)


# ----------------------------------------------------------------------------
# Wrappers
# ----------------------------------------------------------------------------
def _ln_rows(x2, weight, bias, eps):
    R, C = x2.shape
    itemsize = x2.dtype.itemsize
    row_cost = _round_up(C, _LANE) * _elem_cost(itemsize)   # account lane padding
    tm = _pick_row_tile(R, row_cost, itemsize)
    return pl.pallas_call(
        functools.partial(_ln_rows_kernel, eps=float(eps), inv_c=1.0 / C),
        out_shape=jax.ShapeDtypeStruct((R, C), x2.dtype),
        grid=(pl.cdiv(R, tm),),
        in_specs=[
            pl.BlockSpec((tm, C), lambda i: (i, 0)),
            pl.BlockSpec((1, C), lambda i: (0, 0)),
            pl.BlockSpec((1, C), lambda i: (0, 0)),
        ],
        out_specs=pl.BlockSpec((tm, C), lambda i: (i, 0)),
        compiler_params=_mosaic_params(("parallel",)),
    )(x2,
      weight.astype(jnp.float32).reshape(1, C),
      bias.astype(jnp.float32).reshape(1, C))


def _ln_small_c_dense(x2, weight, bias, eps):
    R, C = x2.shape                      # R is a multiple of P = 128 // C
    P = _LANE // C
    R2 = R // P
    xd = x2.reshape(R2, _LANE)           # free, contiguous repack
    itemsize = xd.dtype.itemsize
    wt = jnp.tile(weight.astype(jnp.float32), P).reshape(1, _LANE)
    bt = jnp.tile(bias.astype(jnp.float32), P).reshape(1, _LANE)
    gid = jnp.arange(_LANE, dtype=jnp.int32) // C
    s = (gid[:, None] == gid[None, :]).astype(jnp.float32)   # block-diag ones
    row_cost = _LANE * _elem_cost(itemsize)
    tm = _pick_row_tile(R2, row_cost, itemsize)
    out = pl.pallas_call(
        functools.partial(_ln_dense_kernel, eps=float(eps), inv_c=1.0 / C),
        out_shape=jax.ShapeDtypeStruct((R2, _LANE), xd.dtype),
        grid=(pl.cdiv(R2, tm),),
        in_specs=[
            pl.BlockSpec((tm, _LANE), lambda i: (i, 0)),
            pl.BlockSpec((1, _LANE), lambda i: (0, 0)),
            pl.BlockSpec((1, _LANE), lambda i: (0, 0)),
            pl.BlockSpec((_LANE, _LANE), lambda i: (0, 0)),
        ],
        out_specs=pl.BlockSpec((tm, _LANE), lambda i: (i, 0)),
        compiler_params=_mosaic_params(("parallel",)),
    )(xd, wt, bt, s)
    return out.reshape(R, C)


def _layernorm_channels_last(x, weight, bias, eps):
    orig_shape = x.shape
    C = orig_shape[-1]
    R = int(math.prod(orig_shape[:-1])) if len(orig_shape) > 1 else 1
    x2 = x.reshape(R, C)

    # Lane-dense repack applies when C divides 128.  C = 96/192/... stay on the
    # rows path (>= 75% lane occupancy): packing them needs a 384-wide
    # block-diagonal f32 matmul whose MXU cost exceeds the masked-store saving.
    if C <= 64 and _LANE % C == 0:
        P = _LANE // C
        rows_main = (R // P) * P
        if rows_main == R:
            return _ln_small_c_dense(x2, weight, bias, eps).reshape(orig_shape)
        if rows_main > 0:
            # Ragged row count: keep the bulk lane-dense, finish the (< P-row)
            # tail on the narrow path instead of demoting the whole tensor.
            out_main = _ln_small_c_dense(x2[:rows_main], weight, bias, eps)
            out_tail = _ln_rows(x2[rows_main:], weight, bias, eps)
            return jnp.concatenate([out_main, out_tail], axis=0).reshape(orig_shape)

    return _ln_rows(x2, weight, bias, eps).reshape(orig_shape)


def _layernorm_channels_first(x, weight, bias, eps):
    # Native NCHW path: no transposes; reshape to (N, C, H*W) is free.
    N, C, H, W = x.shape
    HW = H * W
    x3 = x.reshape(N, C, HW)
    itemsize = x3.dtype.itemsize
    budget = _tile_budget()
    col_cost = _round_up(C, _SUBLANE) * _elem_cost(itemsize)   # per lane column

    if HW <= _LANE:
        t_hw = HW                                   # full lane dim (allowed)
    else:
        max_cols = max(_LANE, (budget // max(col_cost, 1)) // _LANE * _LANE)
        t_hw = int(min(max_cols, (HW // _LANE) * _LANE))

    per_image = col_cost * _round_up(t_hw, _LANE)
    nb = int(max(1, min(N, budget // max(per_image, 1))))      # batch images/block
    total_cost = N * col_cost * _round_up(HW, _LANE)
    if total_cost >= _MIN_SPLIT_COST and pl.cdiv(N, nb) * pl.cdiv(HW, t_hw) < 4:
        nb = max(1, min(nb, -(-N // 4)))            # keep >= 4 steps for megacore

    out = pl.pallas_call(
        functools.partial(_ln_cfirst_kernel, eps=float(eps), inv_c=1.0 / C),
        out_shape=jax.ShapeDtypeStruct((N, C, HW), x3.dtype),
        grid=(pl.cdiv(N, nb), pl.cdiv(HW, t_hw)),
        in_specs=[
            pl.BlockSpec((nb, C, t_hw), lambda n, j: (n, 0, j)),
            pl.BlockSpec((1, C, 1), lambda n, j: (0, 0, 0)),
            pl.BlockSpec((1, C, 1), lambda n, j: (0, 0, 0)),
        ],
        out_specs=pl.BlockSpec((nb, C, t_hw), lambda n, j: (n, 0, j)),
        compiler_params=_mosaic_params(("parallel", "parallel")),
    )(x3,
      weight.astype(jnp.float32).reshape(1, C, 1),
      bias.astype(jnp.float32).reshape(1, C, 1))
    return out.reshape(N, C, H, W)


class LayerNormPallas:
    """JAX/Pallas port of the ConvNeXt LayerNorm module (forward only)."""

    def __init__(self, normalized_shape, eps=1e-6, data_format="channels_last"):
        if data_format not in ("channels_last", "channels_first"):
            raise NotImplementedError
        self.weight = jnp.ones((normalized_shape,), dtype=jnp.float32)
        self.bias = jnp.zeros((normalized_shape,), dtype=jnp.float32)
        self.eps = eps
        self.data_format = data_format
        self.normalized_shape = (normalized_shape,)

    def __call__(self, x):
        C = self.normalized_shape[0]
        if self.data_format == "channels_last":
            assert x.shape[-1] == C
            return _layernorm_channels_last(x, self.weight, self.bias, self.eps)
        assert x.ndim == 4 and x.shape[1] == C
        return _layernorm_channels_first(x, self.weight, self.bias, self.eps)


# ----------------------------------------------------------------------------
# Reference + test
# ----------------------------------------------------------------------------
def _reference(x, weight, bias, eps, data_format):
    if data_format == "channels_last":
        u = jnp.mean(x, axis=-1, keepdims=True)
        s = jnp.mean((x - u) ** 2, axis=-1, keepdims=True)
        xn = (x - u) / jnp.sqrt(s + eps)
        return xn * weight + bias
    u = jnp.mean(x, axis=1, keepdims=True)
    s = jnp.mean((x - u) ** 2, axis=1, keepdims=True)
    xn = (x - u) / jnp.sqrt(s + eps)
    return weight[:, None, None] * xn + bias[:, None, None]


if __name__ == "__main__":
    key = jax.random.PRNGKey(0)
    ks = jax.random.split(key, 12)

    # 1) channels_first (typical ConvNeXt/UNet usage): NCHW, C=4
    x_cf = jax.random.normal(ks[0], (2, 4, 16, 16), dtype=jnp.float32)
    ln_cf = LayerNormPallas(4, eps=1e-6, data_format="channels_first")
    ln_cf.weight = jax.random.normal(ks[1], (4,), dtype=jnp.float32)
    ln_cf.bias = jax.random.normal(ks[2], (4,), dtype=jnp.float32)
    y_cf = jax.block_until_ready(ln_cf(x_cf))
    ref_cf = _reference(x_cf, ln_cf.weight, ln_cf.bias, ln_cf.eps, "channels_first")
    assert y_cf.shape == x_cf.shape
    assert jnp.allclose(y_cf, ref_cf, atol=1e-4, rtol=1e-4)

    # 2) channels_last, small C (lane-dense repack path): NHWC, C=4
    x_cl = jax.random.normal(ks[3], (2, 16, 16, 4), dtype=jnp.float32)
    ln_cl = LayerNormPallas(4, eps=1e-6, data_format="channels_last")
    ln_cl.weight = jax.random.normal(ks[4], (4,), dtype=jnp.float32)
    ln_cl.bias = jax.random.normal(ks[5], (4,), dtype=jnp.float32)
    y_cl = jax.block_until_ready(ln_cl(x_cl))
    ref_cl = _reference(x_cl, ln_cl.weight, ln_cl.bias, ln_cl.eps, "channels_last")
    assert jnp.allclose(y_cl, ref_cl, atol=1e-4, rtol=1e-4)

    # 3) channels_last, C multiple of 128 (lane-dense rows path): (2, 8, 256)
    x_big = jax.random.normal(ks[6], (2, 8, 256), dtype=jnp.float32)
    ln_big = LayerNormPallas(256, eps=1e-6, data_format="channels_last")
    y_big = jax.block_until_ready(ln_big(x_big))
    ref_big = _reference(x_big, ln_big.weight, ln_big.bias, ln_big.eps, "channels_last")
    assert jnp.allclose(y_big, ref_big, atol=1e-4, rtol=1e-4)

    # 4) channels_last, ragged row count (dense bulk + narrow tail + concat)
    x_rag = jax.random.normal(ks[7], (3, 20, 4), dtype=jnp.float32)
    ln_rag = LayerNormPallas(4, eps=1e-6, data_format="channels_last")
    y_rag = jax.block_until_ready(ln_rag(x_rag))
    ref_rag = _reference(x_rag, ln_rag.weight, ln_rag.bias, ln_rag.eps, "channels_last")
    assert jnp.allclose(y_rag, ref_rag, atol=1e-4, rtol=1e-4)

    # 5) channels_first, larger spatial (image batching + ragged lane block)
    x_cf2 = jax.random.normal(ks[8], (4, 8, 24, 24), dtype=jnp.float32)
    ln_cf2 = LayerNormPallas(8, eps=1e-6, data_format="channels_first")
    ln_cf2.weight = jax.random.normal(ks[9], (8,), dtype=jnp.float32)
    ln_cf2.bias = jax.random.normal(ks[10], (8,), dtype=jnp.float32)
    y_cf2 = jax.block_until_ready(ln_cf2(x_cf2))
    ref_cf2 = _reference(x_cf2, ln_cf2.weight, ln_cf2.bias, ln_cf2.eps, "channels_first")
    assert jnp.allclose(y_cf2, ref_cf2, atol=1e-4, rtol=1e-4)

    # 6) channels_last, ConvNeXt-like C=96 (rows path, C not dividing 128)
    x_c96 = jax.random.normal(ks[11], (2, 10, 96), dtype=jnp.float32)
    ln_c96 = LayerNormPallas(96, eps=1e-6, data_format="channels_last")
    y_c96 = jax.block_until_ready(ln_c96(x_c96))
    ref_c96 = _reference(x_c96, ln_c96.weight, ln_c96.bias, ln_c96.eps, "channels_last")
    assert jnp.allclose(y_c96, ref_c96, atol=1e-4, rtol=1e-4)

    # 7) channels_last, bf16 input/output (dtype-aware tiling / fp32 accumulation)
    x_bf = jax.random.normal(ks[0], (4, 32, 256), dtype=jnp.float32).astype(jnp.bfloat16)
    ln_bf = LayerNormPallas(256, eps=1e-6, data_format="channels_last")
    y_bf = jax.block_until_ready(ln_bf(x_bf))
    ref_bf = _reference(x_bf.astype(jnp.float32), ln_bf.weight, ln_bf.bias,
                        ln_bf.eps, "channels_last")
    assert y_bf.dtype == jnp.bfloat16
    assert jnp.allclose(y_bf.astype(jnp.float32), ref_bf, atol=5e-2, rtol=5e-2)

    print("KERNEL_OK")
</pallas_src>

<mosaic_0001>
module attributes {stable_mosaic.version = 11 : i64} {
  func.func @_ln_cfirst_kernel(%arg0: i32, %arg1: i32, %arg2: memref<2x4x256xf32, #tpu.memory_space<vmem>>, %arg3: memref<1x4x1xf32, #tpu.memory_space<vmem>>, %arg4: memref<1x4x1xf32, #tpu.memory_space<vmem>>, %arg5: memref<2x4x256xf32, #tpu.memory_space<vmem>>) attributes {dimension_semantics = [#tpu.dimension_semantics<parallel>, #tpu.dimension_semantics<parallel>], iteration_bounds = array<i64: 1, 1>, scalar_prefetch = 0 : i64, scratch_operands = 0 : i64, tpu.core_type = #tpu.core_type<tc>, window_params = [{transform_indices = @transform_0, window_bounds = array<i64: 2, 4, 256>}, {pipeline_mode = #tpu.pipeline_mode<synchronous>, transform_indices = @transform_1, window_bounds = array<i64: 1, 4, 1>}, {pipeline_mode = #tpu.pipeline_mode<synchronous>, transform_indices = @transform_2, window_bounds = array<i64: 1, 4, 1>}, {transform_indices = @transform_3, window_bounds = array<i64: 2, 4, 256>}]} {
    %c0 = arith.constant 0 : index
    %c0_0 = arith.constant 0 : index
    %c0_1 = arith.constant 0 : index
    %0 = vector.load %arg2[%c0, %c0_0, %c0_1] : memref<2x4x256xf32, #tpu.memory_space<vmem>>, vector<2x4x256xf32>
    %cst = arith.constant dense<0.000000e+00> : vector<2x256xf32>
    %1 = vector.multi_reduction <add>, %0, %cst [1] : vector<2x4x256xf32> to vector<2x256xf32>
    %2 = vector.shape_cast %1 : vector<2x256xf32> to vector<2x1x256xf32>
    %cst_2 = arith.constant 2.500000e-01 : f32
    %3 = vector.broadcast %cst_2 : f32 to vector<2x1x256xf32>
    %4 = arith.mulf %2, %3 : vector<2x1x256xf32>
    %5 = vector.broadcast %4 : vector<2x1x256xf32> to vector<2x4x256xf32>
    %6 = arith.subf %0, %5 : vector<2x4x256xf32>
    %7 = arith.mulf %6, %6 : vector<2x4x256xf32>
    %cst_3 = arith.constant dense<0.000000e+00> : vector<2x256xf32>
    %8 = vector.multi_reduction <add>, %7, %cst_3 [1] : vector<2x4x256xf32> to vector<2x256xf32>
    %9 = vector.shape_cast %8 : vector<2x256xf32> to vector<2x1x256xf32>
    %cst_4 = arith.constant 2.500000e-01 : f32
    %10 = vector.broadcast %cst_4 : f32 to vector<2x1x256xf32>
    %11 = arith.mulf %9, %10 : vector<2x1x256xf32>
    %cst_5 = arith.constant 9.99999997E-7 : f32
    %12 = vector.broadcast %cst_5 : f32 to vector<2x1x256xf32>
    %13 = arith.addf %11, %12 : vector<2x1x256xf32>
    %14 = math.rsqrt %13 : vector<2x1x256xf32>
    %c0_6 = arith.constant 0 : index
    %c0_7 = arith.constant 0 : index
    %c0_8 = arith.constant 0 : index
    %15 = vector.load %arg3[%c0_6, %c0_7, %c0_8] : memref<1x4x1xf32, #tpu.memory_space<vmem>>, vector<1x4x1xf32>
    %c0_9 = arith.constant 0 : index
    %c0_10 = arith.constant 0 : index
    %c0_11 = arith.constant 0 : index
    %16 = vector.load %arg4[%c0_9, %c0_10, %c0_11] : memref<1x4x1xf32, #tpu.memory_space<vmem>>, vector<1x4x1xf32>
    %17 = vector.broadcast %14 : vector<2x1x256xf32> to vector<2x4x256xf32>
    %18 = arith.mulf %6, %17 : vector<2x4x256xf32>
    %19 = vector.broadcast %15 : vector<1x4x1xf32> to vector<2x4x256xf32>
    %20 = arith.mulf %18, %19 : vector<2x4x256xf32>
    %21 = vector.broadcast %16 : vector<1x4x1xf32> to vector<2x4x256xf32>
    %22 = arith.addf %20, %21 : vector<2x4x256xf32>
    %c0_12 = arith.constant 0 : index
    %c0_13 = arith.constant 0 : index
    %c0_14 = arith.constant 0 : index
    %23 = vector.load %arg5[%c0_12, %c0_13, %c0_14] : memref<2x4x256xf32, #tpu.memory_space<vmem>>, vector<2x4x256xf32>
    tpu.vector_store %arg5[%c0_12, %c0_13, %c0_14], %22 {strides = array<i32>} : memref<2x4x256xf32, #tpu.memory_space<vmem>>, vector<2x4x256xf32>,
    return
  }
  func.func @transform_0(%arg0: i32, %arg1: i32) -> (i32, i32, i32) {
    %c0_i32 = arith.constant 0 : i32
    %c0_i32_0 = arith.constant 0 : i32
    return %arg0, %c0_i32, %arg1 : i32, i32, i32
  }
  func.func @transform_1(%arg0: i32, %arg1: i32) -> (i32, i32, i32) {
    %c0_i32 = arith.constant 0 : i32
    %c0_i32_0 = arith.constant 0 : i32
    %c0_i32_1 = arith.constant 0 : i32
    %c0_i32_2 = arith.constant 0 : i32
    return %c0_i32, %c0_i32_0, %c0_i32_1 : i32, i32, i32
  }
  func.func @transform_2(%arg0: i32, %arg1: i32) -> (i32, i32, i32) {
    %c0_i32 = arith.constant 0 : i32
    %c0_i32_0 = arith.constant 0 : i32
    %c0_i32_1 = arith.constant 0 : i32
    %c0_i32_2 = arith.constant 0 : i32
    return %c0_i32, %c0_i32_0, %c0_i32_1 : i32, i32, i32
  }
  func.func @transform_3(%arg0: i32, %arg1: i32) -> (i32, i32, i32) {
    %c0_i32 = arith.constant 0 : i32
    %c0_i32_0 = arith.constant 0 : i32
    return %arg0, %c0_i32, %arg1 : i32, i32, i32
  }
}

</mosaic_0001>

<llo_original>
// kernel: tpu_custom_call.1
$region0: #{tpu_custom_call.1}
  #allocation0 [shape = 'u32[]', space=smem, size = 0x4, offset = 0x4, fixed_abs, tag = 'smem constant byte address 0x4 - core index']
  #allocation1 [shape = 'u32[72,128]{1,0:T(1,128)}', space=vmem, size = 0x9000, scoped, tag = 'internal scratch']
  %s0 = inlined_call_operand.hbm [shape: f32[2,4,256], index: 0, kind: input, shape index: {}]
  %s1 = inlined_call_operand.vmem [shape: f32[1,4,1], index: 1, kind: input, shape index: {}]
  %s2 = inlined_call_operand.vmem [shape: f32[1,4,1], index: 2, kind: input, shape index: {}]
  %s3 = inlined_call_operand.hbm [shape: f32[2,4,256], index: 3, kind: output, shape index: {}]
  %s4 = sld [smem:[#allocation0]]
  $region26: #{tpu_custom_call.1} parent=0
    _
  %s6 = ssub.s32 1, %s4
  %s7 = scalar_select 0, %s6, %s4
  $region1: #{tpu_custom_call.1} parent=0
    #allocation2 [shape = 'u8[8192]{0}', space=vmem, size = 0x2000, scoped, tag = 'input window, operand 0, single buffered']
    #allocation3 [shape = 's32[1]{0}', space=sflag, size = 0x4, scoped, tag = 'scoped memory for tpu_custom_call.1']
    #allocation4 [shape = 's32[1]{0}', space=sflag, size = 0x4, scoped, tag = 'scoped memory for tpu_custom_call.1']
    #allocation5 [shape = 'u8[8192]{0}', space=vmem, size = 0x2000, scoped, tag = 'output window, operand 0, single buffered']
    %8 = vsyncpa [#allocation3], 0
    %9 = vsyncpa [#allocation4], 0
    // Predicated region
    $region2: #{tpu_custom_call.1} parent=1 // pred_check
      _
    $region3: #{tpu_custom_call.1} parent=1 // pred_check_branch
      %11 = sbr.rel (0) target = $region5
    $region4: #{tpu_custom_call.1} parent=1 // pred_region
      %13 = vsyncadd [#allocation3], 0
      %s14 = sshll.u32 %s0, 4
      %s15 = int_to_ptr.hbm [resolvable:$true] %s14
      %s16 = sshll.u32 [#allocation2], 4
      %s17 = int_to_ptr.vmem [resolvable:$true] %s16
      %22 = dma.hbm_to_vmem [thread:$0]  %s15, 256, %s17, [#allocation3], 128, 128, 8
    $region5: #{tpu_custom_call.1} parent=1 // pred_fallthru
      _
    // Predicated region
    $region6: #{tpu_custom_call.1} parent=1 // pred_check
      _
    $region7: #{tpu_custom_call.1} parent=1 // pred_check_branch
      %24 = sbr.rel (0) target = $region9
    $region8: #{tpu_custom_call.1} parent=1 // pred_region
      _
    $region9: #{tpu_custom_call.1} parent=1 // pred_fallthru
      _
    // Predicated region
    $region10: #{tpu_custom_call.1} parent=1 // pred_check
      _
    $region11: #{tpu_custom_call.1} parent=1 // pred_check_branch
      %26 = sbr.rel (0) target = $region13
    $region12: #{tpu_custom_call.1} parent=1 // pred_region
      _
    $region13: #{tpu_custom_call.1} parent=1 // pred_fallthru
      _
    // Predicated region
    $region14: #{tpu_custom_call.1} parent=1 // pred_check
      _
    $region15: #{tpu_custom_call.1} parent=1 // pred_check_branch
      %28 = sbr.rel (0) target = $region17
    $region16: #{tpu_custom_call.1} parent=1 // pred_region
      %30 = dma.done [#allocation3], 256
    $region17: #{tpu_custom_call.1} parent=1 // pred_fallthru
      _
    %v31 = vld [vmem:[#allocation2] sm:$0xff]
    %v32 = vld [vmem:[#allocation2 + $0x8] sm:$0xff]
    %35 = vst [vmem:[#allocation1] ss:$2 sm:$0xff] %v31
    %v36 = vld.sshfl [vmem:[#allocation1] sm:$0xff pattern:$0x75316420]
    %v37 = vld.sshfl [vmem:[#allocation1 + $0x8] sm:$0xff pattern:$0x75316420]
    %s38 = scalar_lea.vmem [#allocation1], 16
    %39 = vst [vmem:[%s38] ss:$2 sm:$0xff] %v32
    %v40 = vld.sshfl [vmem:[#allocation1 + $0x10] sm:$0xff pattern:$0x75316420]
    %v41 = vld.sshfl [vmem:[#allocation1 + $0x18] sm:$0xff pattern:$0x75316420]
    %vm46 = vcmask 1043456
    %v47 = vsel %vm46, %v36, 0.0
    %v48 = vrot.slane %v47, 4
    %v49 = vadd.f32 %v47, %v48
    %v50 = vrot.slane %v49, 2
    %v51 = vadd.f32 %v49, %v50
    %v52 = vrot.slane %v51, 1
    %v53 = vadd.f32 %v51, %v52
    %v54 = vsel %vm46, %v37, 0.0
    %v55 = vrot.slane %v54, 4
    %v56 = vadd.f32 %v54, %v55
    %v57 = vrot.slane %v56, 2
    %v58 = vadd.f32 %v56, %v57
    %v59 = vrot.slane %v58, 1
    %v60 = vadd.f32 %v58, %v59
    %v61 = vsel %vm46, %v40, 0.0
    %v62 = vrot.slane %v61, 4
    %v63 = vadd.f32 %v61, %v62
    %v64 = vrot.slane %v63, 2
    %v65 = vadd.f32 %v63, %v64
    %v66 = vrot.slane %v65, 1
    %v67 = vadd.f32 %v65, %v66
    %v68 = vsel %vm46, %v41, 0.0
    %v69 = vrot.slane %v68, 4
    %v70 = vadd.f32 %v68, %v69
    %v71 = vrot.slane %v70, 2
    %v72 = vadd.f32 %v70, %v71
    %v73 = vrot.slane %v72, 1
    %v74 = vadd.f32 %v72, %v73
    %v75 = vmul.f32 %v53, 0.25
    %v76 = vmul.f32 %v60, 0.25
    %v77 = vmul.f32 %v67, 0.25
    %v78 = vmul.f32 %v74, 0.25
    %v83 = vrot.slane %v76, 4
    %v84 = vrot.slane %v78, 4
    %v85 = vsel %vm46, %v75, %v83
    %v86 = vsel %vm46, %v77, %v84
    %v89 = vsub.f32 %v31, %v85
    %v90 = vsub.f32 %v32, %v86
    %v91 = vmul.f32 %v89, %v89
    %v92 = vmul.f32 %v90, %v90
    %95 = vst [vmem:[#allocation1] ss:$2 sm:$0xff] %v91
    %v96 = vld.sshfl [vmem:[#allocation1] sm:$0xff pattern:$0x75316420]
    %v97 = vld.sshfl [vmem:[#allocation1 + $0x8] sm:$0xff pattern:$0x75316420]
    %s98 = scalar_lea.vmem [#allocation1], 16
    %99 = vst [vmem:[%s98] ss:$2 sm:$0xff] %v92
    %v100 = vld.sshfl [vmem:[#allocation1 + $0x10] sm:$0xff pattern:$0x75316420]
    %v101 = vld.sshfl [vmem:[#allocation1 + $0x18] sm:$0xff pattern:$0x75316420]
    %v106 = vsel %vm46, %v96, 0.0
    %v107 = vrot.slane %v106, 4
    %v108 = vadd.f32 %v106, %v107
    %v109 = vrot.slane %v108, 2
    %v110 = vadd.f32 %v108, %v109
    %v111 = vrot.slane %v110, 1
    %v112 = vadd.f32 %v110, %v111
    %v113 = vsel %vm46, %v97, 0.0
    %v114 = vrot.slane %v113, 4
    %v115 = vadd.f32 %v113, %v114
    %v116 = vrot.slane %v115, 2
    %v117 = vadd.f32 %v115, %v116
    %v118 = vrot.slane %v117, 1
    %v119 = vadd.f32 %v117, %v118
    %v120 = vsel %vm46, %v100, 0.0
    %v121 = vrot.slane %v120, 4
    %v122 = vadd.f32 %v120, %v121
    %v123 = vrot.slane %v122, 2
    %v124 = vadd.f32 %v122, %v123
    %v125 = vrot.slane %v124, 1
    %v126 = vadd.f32 %v124, %v125
    %v127 = vsel %vm46, %v101, 0.0
    %v128 = vrot.slane %v127, 4
    %v129 = vadd.f32 %v127, %v128
    %v130 = vrot.slane %v129, 2
    %v131 = vadd.f32 %v129, %v130
    %v132 = vrot.slane %v131, 1
    %v133 = vadd.f32 %v131, %v132
    %v134 = vmul.f32 %v112, 0.25
    %v135 = vmul.f32 %v119, 0.25
    %v136 = vmul.f32 %v126, 0.25
    %v137 = vmul.f32 %v133, 0.25
    %v138 = vadd.f32 %v134, 1e-06
    %v139 = vadd.f32 %v135, 1e-06
    %v140 = vadd.f32 %v136, 1e-06
    %v141 = vadd.f32 %v137, 1e-06
    %v142 = vrsqrt.pop %v138
    %v143 = vmul.f32 %v142, %v138
    %v144 = vmul.f32 %v143, %v142
    %v145 = vmul.f32 0.5, %v144
    %v146 = vsub.f32 1.5, %v145
    %v147 = vmul.f32 %v142, %v146
    %vm148 = vweird.f32 %v138
    %vm149 = vweird.f32 %v142
    %vm150 = vmor %vm148, %vm149
    %v151 = vsel %vm150, %v142, %v147
    %v152 = vrsqrt.pop %v139
    %v153 = vmul.f32 %v152, %v139
    %v154 = vmul.f32 %v153, %v152
    %v155 = vmul.f32 0.5, %v154
    %v156 = vsub.f32 1.5, %v155
    %v157 = vmul.f32 %v152, %v156
    %vm158 = vweird.f32 %v139
    %vm159 = vweird.f32 %v152
    %vm160 = vmor %vm158, %vm159
    %v161 = vsel %vm160, %v152, %v157
    %v162 = vrsqrt.pop %v140
    %v163 = vmul.f32 %v162, %v140
    %v164 = vmul.f32 %v163, %v162
    %v165 = vmul.f32 0.5, %v164
    %v166 = vsub.f32 1.5, %v165
    %v167 = vmul.f32 %v162, %v166
    %vm168 = vweird.f32 %v140
    %vm169 = vweird.f32 %v162
    %vm170 = vmor %vm168, %vm169
    %v171 = vsel %vm170, %v162, %v167
    %v172 = vrsqrt.pop %v141
    %v173 = vmul.f32 %v172, %v141
    %v174 = vmul.f32 %v173, %v172
    %v175 = vmul.f32 0.5, %v174
    %v176 = vsub.f32 1.5, %v175
    %v177 = vmul.f32 %v172, %v176
    %vm178 = vweird.f32 %v141
    %vm179 = vweird.f32 %v172
    %vm180 = vmor %vm178, %vm179
    %v181 = vsel %vm180, %v172, %v177
    %v182 = vld [vmem:[%s1] sm:$0xf]
    %v183 = vld [vmem:[%s2] sm:$0xf]
    %v188 = vrot.slane %v161, 4
    %v189 = vrot.slane %v181, 4
    %v190 = vsel %vm46, %v151, %v188
    %v191 = vsel %vm46, %v171, %v189
    %v194 = vmul.f32 %v89, %v190
    %v195 = vmul.f32 %v90, %v191
    %197 = vset.pattern.permute.xlu0 0
    %198 = vperm.xlu0 %197, %v182
    %v199 = vpop.permute.xlu0 %198
    %v201 = vunpack.c.l.s4 839922192
    %v202 = vunpack.c.0.s8 %v201
    %v203 = vperm.slane %v199, %v202
    %v205 = vmul.f32 %v194, %v203
    %v206 = vmul.f32 %v195, %v203
    %208 = vset.pattern.permute.xlu0 0
    %209 = vperm.xlu0 %208, %v183
    %v210 = vpop.permute.xlu0 %209
    %v212 = vunpack.c.l.s4 839922192
    %v213 = vunpack.c.0.s8 %v212
    %v214 = vperm.slane %v210, %v213
    %v216 = vadd.f32 %v205, %v214
    %v217 = vadd.f32 %v206, %v214
    %218 = vst [vmem:[#allocation5] sm:$0xff] %v216
    %219 = vst [vmem:[#allocation5 + $0x8] sm:$0xff] %v217
    // Predicated region
    $region18: #{tpu_custom_call.1} parent=1 // pred_check
      _
    $region19: #{tpu_custom_call.1} parent=1 // pred_check_branch
      %221 = sbr.rel (0) target = $region21
    $region20: #{tpu_custom_call.1} parent=1 // pred_region
      %223 = vsyncadd [#allocation4], 0
      %s224 = sshll.u32 [#allocation5], 4
      %s225 = int_to_ptr.vmem [resolvable:$true] %s224
      %s226 = sshll.u32 %s3, 4
      %s227 = int_to_ptr.hbm [resolvable:$true] %s226
      %232 = dma.vmem_to_hbm [thread:$0]  %s225, 256, %s227, [#allocation4], 128, 128, 8
    $region21: #{tpu_custom_call.1} parent=1 // pred_fallthru
      _
    // Predicated region
    $region22: #{tpu_custom_call.1} parent=1 // pred_check
      _
    $region23: #{tpu_custom_call.1} parent=1 // pred_check_branch
      %234 = sbr.rel (0) target = $region25
    $region24: #{tpu_custom_call.1} parent=1 // pred_region
      %236 = dma.done [#allocation4], 256
    $region25: #{tpu_custom_call.1} parent=1 // pred_fallthru
      _
    %237 = vsyncpa [#allocation3], 1
    %238 = vsyncpa [#allocation4], 1

</llo_original>
